<compile_context>
chip_gen: v5e
topology: v5e:2x2
jax: 0.10.0
libtpu: 0.0.40
codegen_flags: <defaults>
</compile_context>

<pallas_src>
import functools

import jax
import jax.numpy as jnp
from jax.experimental import pallas as pl
from jax.experimental.pallas import tpu as pltpu


def _round_up(x, m):
    return ((x + m - 1) // m) * m


# ---------------------------------------------------------------------------
# Fused kernel: the entire MLP for one batch tile.
# refs = (x_ref, w0_ref, b0_ref, w1_ref, b1_ref, ..., o_ref)
# ---------------------------------------------------------------------------
def _mlp_fused_kernel(*refs, activation, n_layers):
    x_ref = refs[0]
    o_ref = refs[-1]
    h = x_ref[...]                      # bf16 (TB, D0_pad)
    for i in range(n_layers):
        w = refs[1 + 2 * i][...]        # bf16 (Din_pad, Dout_pad)
        b = refs[2 + 2 * i][...]        # f32  (1, Dout_pad)
        y = jnp.dot(h, w, preferred_element_type=jnp.float32) + b
        if i < n_layers - 1:
            if activation == "relu":
                y = jnp.maximum(y, 0.0)
            else:  # "tanh"
                y = jnp.tanh(y)
            h = y.astype(jnp.bfloat16)  # next layer's MXU input
        else:
            h = y                       # final layer: no activation, keep f32
    o_ref[...] = h.astype(o_ref.dtype)


# ---------------------------------------------------------------------------
# One-time parameter preparation: pad to lane-dense shapes and cast.
# Weights -> bf16 (Din_pad, Dout_pad), biases -> f32 (1, Dout_pad).
# Call this once; reuse the result for every forward call.
# ---------------------------------------------------------------------------
def prepare_padded_params(params):
    dims = [params[0][0].shape[0]] + [w.shape[1] for (w, _) in params]
    dims_pad = [_round_up(max(d, 128), 128) for d in dims]
    flat = []
    for li, (w, b) in enumerate(params):
        din, dout = w.shape
        w_p = jnp.zeros((dims_pad[li], dims_pad[li + 1]), jnp.bfloat16)
        w_p = w_p.at[:din, :dout].set(w.astype(jnp.bfloat16))
        b_p = jnp.zeros((1, dims_pad[li + 1]), jnp.float32)
        b_p = b_p.at[:, :dout].set(jnp.reshape(b, (1, -1)).astype(jnp.float32))
        flat += [w_p, b_p]
    return tuple(flat)


# ---------------------------------------------------------------------------
# Forward: one jitted function -> one fused, batch-tiled pallas_call.
# Per-call work is only: pad/cast x, launch kernel, slice output.
# ---------------------------------------------------------------------------
@functools.partial(jax.jit, static_argnames=("activation", "out_dim"))
def neural_network_forward(padded_params, x, activation, out_dim):
    """Equivalent of NeuralNetwork.forward: [Linear, act] * hidden_layers, Linear."""
    assert activation in ("relu", "tanh")
    n_layers = len(padded_params) // 2
    batch, in_dim = x.shape

    # Padded feature dims are baked into the prepared params.
    d0_pad = padded_params[0].shape[0]
    dlast_pad = padded_params[-1].shape[1]

    # Batch tiling: bf16 packs 16 sublanes/vreg -> pad to multiples of 16.
    # For large batches use 256-row tiles so x/out DMA pipelines and the
    # "parallel" axis can shard across TensorCores (v7x).
    if batch >= 256:
        tb = 256
    else:
        tb = _round_up(max(batch, 16), 16)
    b_pad = _round_up(max(batch, tb), tb)
    n_tiles = b_pad // tb

    # Pad + cast x (the only per-call prep).
    x_p = jnp.zeros((b_pad, d0_pad), jnp.bfloat16)
    x_p = x_p.at[:batch, :in_dim].set(x.astype(jnp.bfloat16))

    # BlockSpecs: x/out move with the batch grid axis; weights/biases stay
    # resident (constant block index -> loaded once, no re-DMA per tile).
    in_specs = [pl.BlockSpec((tb, d0_pad), lambda i: (i, 0))]
    for p in padded_params:
        shp = p.shape
        in_specs.append(pl.BlockSpec(shp, lambda i: (0, 0)))
    out_specs = pl.BlockSpec((tb, dlast_pad), lambda i: (i, 0))

    # Right-sized VMEM budget: padded params + double-buffered x/out tiles
    # + intermediate-activation headroom, clamped for v7x's 64 MiB VMEM.
    param_bytes = sum(int(p.size) * p.dtype.itemsize for p in padded_params)
    io_bytes = 2 * (tb * d0_pad * 2 + tb * dlast_pad * 4)
    act_bytes = 4 * tb * max(p.shape[-1] for p in padded_params)
    vmem_limit = int(1.5 * (param_bytes + io_bytes + act_bytes)) + (4 << 20)
    vmem_limit = max(8 << 20, min(vmem_limit, 32 << 20))

    # Advisory cost estimate for XLA scheduling.
    flops = 0
    transcendentals = 0
    for i in range(n_layers):
        din_p, dout_p = padded_params[2 * i].shape
        flops += 2 * b_pad * din_p * dout_p
        if activation == "tanh" and i < n_layers - 1:
            transcendentals += b_pad * dout_p
    bytes_accessed = int(
        param_bytes + b_pad * d0_pad * 2 + b_pad * dlast_pad * 4
    )

    kernel = functools.partial(
        _mlp_fused_kernel, activation=activation, n_layers=n_layers
    )
    out_p = pl.pallas_call(
        kernel,
        out_shape=jax.ShapeDtypeStruct((b_pad, dlast_pad), jnp.float32),
        grid=(n_tiles,),
        in_specs=in_specs,
        out_specs=out_specs,
        compiler_params=pltpu.CompilerParams(
            dimension_semantics=("parallel",),
            vmem_limit_bytes=vmem_limit,
        ),
        cost_estimate=pl.CostEstimate(
            flops=int(flops),
            transcendentals=int(transcendentals),
            bytes_accessed=bytes_accessed,
        ),
    )(x_p, *padded_params)

    # Slice the zero padding back off.
    return out_p[:batch, :out_dim]


# ---------------------------------------------------------------------------
# Parameter construction mimicking nn.Linear default init.
# Weights stored as (in_features, out_features); bias as (1, out_features).
# ---------------------------------------------------------------------------
def init_neural_network_params(key, input_dim, output_dim, hidden_size, hidden_layers):
    dims = [input_dim] + [hidden_size] * hidden_layers + [output_dim]
    params = []
    for i in range(len(dims) - 1):
        fan_in, fan_out = dims[i], dims[i + 1]
        key, kw, kb = jax.random.split(key, 3)
        bound = 1.0 / jnp.sqrt(jnp.float32(fan_in))
        w = jax.random.uniform(
            kw, (fan_in, fan_out), jnp.float32, minval=-bound, maxval=bound
        )
        b = jax.random.uniform(
            kb, (1, fan_out), jnp.float32, minval=-bound, maxval=bound
        )
        params.append((w, b))
    return params


# ---------------------------------------------------------------------------
# Pure-JAX reference emulating the same bf16-weight / f32-accumulate path.
# ---------------------------------------------------------------------------
def _reference_forward(params, x, activation):
    h = x.astype(jnp.bfloat16)
    for idx, (w, b) in enumerate(params):
        y = jnp.dot(h, w.astype(jnp.bfloat16), preferred_element_type=jnp.float32)
        y = y + b.astype(jnp.float32)
        if idx < len(params) - 1:
            y = jnp.maximum(y, 0.0) if activation == "relu" else jnp.tanh(y)
            h = y.astype(jnp.bfloat16)
        else:
            h = y
    return h


# ---------------------------------------------------------------------------
if __name__ == "__main__":
    batch = 8
    input_dim = 16
    output_dim = 4
    hidden_size = 32
    hidden_layers = 2

    key = jax.random.PRNGKey(0)
    key, kx = jax.random.split(key)
    x = jax.random.normal(kx, (batch, input_dim), jnp.float32)

    params = init_neural_network_params(
        key, input_dim, output_dim, hidden_size, hidden_layers
    )
    # One-time padded/cast parameter prep (hoisted out of the per-call path).
    padded_params = prepare_padded_params(params)
    padded_params = jax.block_until_ready(padded_params)

    ok = True
    for activation in ("relu", "tanh"):
        out = neural_network_forward(padded_params, x, activation, output_dim)
        out = jax.block_until_ready(out)
        assert out.shape == (batch, output_dim)

        # Match the bf16-weight / f32-accumulate path.
        ref = _reference_forward(params, x, activation)
        ok = ok and bool(jnp.allclose(out, ref, atol=1e-3, rtol=1e-3))

        # Sanity vs. a pure-f32 reference (loose tolerance due to bf16 weights).
        h = x
        for idx, (w, b) in enumerate(params):
            h = h @ w + b
            if idx < len(params) - 1:
                h = jnp.maximum(h, 0.0) if activation == "relu" else jnp.tanh(h)
        ok = ok and bool(jnp.allclose(out, h, atol=5e-2, rtol=5e-2))

    assert ok, "mismatch vs reference"
    print("KERNEL_OK")
</pallas_src>

<mosaic_0001>
module attributes {stable_mosaic.version = 11 : i64} {
  func.func @_mlp_fused_kernel(%arg0: i32, %arg1: memref<16x128xbf16, #tpu.memory_space<vmem>>, %arg2: memref<128x128xbf16, #tpu.memory_space<vmem>>, %arg3: memref<1x128xf32, #tpu.memory_space<vmem>>, %arg4: memref<128x128xbf16, #tpu.memory_space<vmem>>, %arg5: memref<1x128xf32, #tpu.memory_space<vmem>>, %arg6: memref<128x128xbf16, #tpu.memory_space<vmem>>, %arg7: memref<1x128xf32, #tpu.memory_space<vmem>>, %arg8: memref<16x128xf32, #tpu.memory_space<vmem>>) attributes {dimension_semantics = [#tpu.dimension_semantics<parallel>], iteration_bounds = array<i64: 1>, scalar_prefetch = 0 : i64, scratch_operands = 0 : i64, tpu.core_type = #tpu.core_type<tc>, window_params = [{transform_indices = @transform_0, window_bounds = array<i64: 16, 128>}, {pipeline_mode = #tpu.pipeline_mode<synchronous>, transform_indices = @transform_1, window_bounds = array<i64: 128, 128>}, {pipeline_mode = #tpu.pipeline_mode<synchronous>, transform_indices = @transform_2, window_bounds = array<i64: 1, 128>}, {pipeline_mode = #tpu.pipeline_mode<synchronous>, transform_indices = @transform_3, window_bounds = array<i64: 128, 128>}, {pipeline_mode = #tpu.pipeline_mode<synchronous>, transform_indices = @transform_4, window_bounds = array<i64: 1, 128>}, {pipeline_mode = #tpu.pipeline_mode<synchronous>, transform_indices = @transform_5, window_bounds = array<i64: 128, 128>}, {pipeline_mode = #tpu.pipeline_mode<synchronous>, transform_indices = @transform_6, window_bounds = array<i64: 1, 128>}, {transform_indices = @transform_7, window_bounds = array<i64: 16, 128>}]} {
    %c0 = arith.constant 0 : index
    %c0_0 = arith.constant 0 : index
    %0 = vector.load %arg1[%c0, %c0_0] : memref<16x128xbf16, #tpu.memory_space<vmem>>, vector<16x128xbf16>
    %c0_1 = arith.constant 0 : index
    %c0_2 = arith.constant 0 : index
    %1 = vector.load %arg2[%c0_1, %c0_2] : memref<128x128xbf16, #tpu.memory_space<vmem>>, vector<128x128xbf16>
    %c0_3 = arith.constant 0 : index
    %c0_4 = arith.constant 0 : index
    %2 = vector.load %arg3[%c0_3, %c0_4] : memref<1x128xf32, #tpu.memory_space<vmem>>, vector<1x128xf32>
    %cst = arith.constant dense<0.000000e+00> : vector<16x128xf32>
    %3 = tpu.matmul %0, %1, %cst {dimension_numbers = #tpu.dot_dimension_numbers<[1], [0], [0], [1], [0, 0, 1, 1], [], []>} : vector<16x128xbf16>, vector<128x128xbf16>, vector<16x128xf32> -> vector<16x128xf32>
    %4 = vector.broadcast %2 : vector<1x128xf32> to vector<16x128xf32>
    %5 = arith.addf %3, %4 : vector<16x128xf32>
    %cst_5 = arith.constant 0.000000e+00 : f32
    %6 = vector.broadcast %cst_5 : f32 to vector<16x128xf32>
    %7 = arith.maximumf %5, %6 : vector<16x128xf32>
    %8 = arith.truncf %7 : vector<16x128xf32> to vector<16x128xbf16>
    %c0_6 = arith.constant 0 : index
    %c0_7 = arith.constant 0 : index
    %9 = vector.load %arg4[%c0_6, %c0_7] : memref<128x128xbf16, #tpu.memory_space<vmem>>, vector<128x128xbf16>
    %c0_8 = arith.constant 0 : index
    %c0_9 = arith.constant 0 : index
    %10 = vector.load %arg5[%c0_8, %c0_9] : memref<1x128xf32, #tpu.memory_space<vmem>>, vector<1x128xf32>
    %cst_10 = arith.constant dense<0.000000e+00> : vector<16x128xf32>
    %11 = tpu.matmul %8, %9, %cst_10 {dimension_numbers = #tpu.dot_dimension_numbers<[1], [0], [0], [1], [0, 0, 1, 1], [], []>} : vector<16x128xbf16>, vector<128x128xbf16>, vector<16x128xf32> -> vector<16x128xf32>
    %12 = vector.broadcast %10 : vector<1x128xf32> to vector<16x128xf32>
    %13 = arith.addf %11, %12 : vector<16x128xf32>
    %cst_11 = arith.constant 0.000000e+00 : f32
    %14 = vector.broadcast %cst_11 : f32 to vector<16x128xf32>
    %15 = arith.maximumf %13, %14 : vector<16x128xf32>
    %16 = arith.truncf %15 : vector<16x128xf32> to vector<16x128xbf16>
    %c0_12 = arith.constant 0 : index
    %c0_13 = arith.constant 0 : index
    %17 = vector.load %arg6[%c0_12, %c0_13] : memref<128x128xbf16, #tpu.memory_space<vmem>>, vector<128x128xbf16>
    %c0_14 = arith.constant 0 : index
    %c0_15 = arith.constant 0 : index
    %18 = vector.load %arg7[%c0_14, %c0_15] : memref<1x128xf32, #tpu.memory_space<vmem>>, vector<1x128xf32>
    %cst_16 = arith.constant dense<0.000000e+00> : vector<16x128xf32>
    %19 = tpu.matmul %16, %17, %cst_16 {dimension_numbers = #tpu.dot_dimension_numbers<[1], [0], [0], [1], [0, 0, 1, 1], [], []>} : vector<16x128xbf16>, vector<128x128xbf16>, vector<16x128xf32> -> vector<16x128xf32>
    %20 = vector.broadcast %18 : vector<1x128xf32> to vector<16x128xf32>
    %21 = arith.addf %19, %20 : vector<16x128xf32>
    %c0_17 = arith.constant 0 : index
    %c0_18 = arith.constant 0 : index
    %22 = vector.load %arg8[%c0_17, %c0_18] : memref<16x128xf32, #tpu.memory_space<vmem>>, vector<16x128xf32>
    tpu.vector_store %arg8[%c0_17, %c0_18], %21 {strides = array<i32>} : memref<16x128xf32, #tpu.memory_space<vmem>>, vector<16x128xf32>,
    return
  }
  func.func @transform_0(%arg0: i32) -> (i32, i32) {
    %c0_i32 = arith.constant 0 : i32
    %c0_i32_0 = arith.constant 0 : i32
    return %arg0, %c0_i32 : i32, i32
  }
  func.func @transform_1(%arg0: i32) -> (i32, i32) {
    %c0_i32 = arith.constant 0 : i32
    %c0_i32_0 = arith.constant 0 : i32
    %c0_i32_1 = arith.constant 0 : i32
    return %c0_i32, %c0_i32_0 : i32, i32
  }
  func.func @transform_2(%arg0: i32) -> (i32, i32) {
    %c0_i32 = arith.constant 0 : i32
    %c0_i32_0 = arith.constant 0 : i32
    %c0_i32_1 = arith.constant 0 : i32
    return %c0_i32, %c0_i32_0 : i32, i32
  }
  func.func @transform_3(%arg0: i32) -> (i32, i32) {
    %c0_i32 = arith.constant 0 : i32
    %c0_i32_0 = arith.constant 0 : i32
    %c0_i32_1 = arith.constant 0 : i32
    return %c0_i32, %c0_i32_0 : i32, i32
  }
  func.func @transform_4(%arg0: i32) -> (i32, i32) {
    %c0_i32 = arith.constant 0 : i32
    %c0_i32_0 = arith.constant 0 : i32
    %c0_i32_1 = arith.constant 0 : i32
    return %c0_i32, %c0_i32_0 : i32, i32
  }
  func.func @transform_5(%arg0: i32) -> (i32, i32) {
    %c0_i32 = arith.constant 0 : i32
    %c0_i32_0 = arith.constant 0 : i32
    %c0_i32_1 = arith.constant 0 : i32
    return %c0_i32, %c0_i32_0 : i32, i32
  }
  func.func @transform_6(%arg0: i32) -> (i32, i32) {
    %c0_i32 = arith.constant 0 : i32
    %c0_i32_0 = arith.constant 0 : i32
    %c0_i32_1 = arith.constant 0 : i32
    return %c0_i32, %c0_i32_0 : i32, i32
  }
  func.func @transform_7(%arg0: i32) -> (i32, i32) {
    %c0_i32 = arith.constant 0 : i32
    %c0_i32_0 = arith.constant 0 : i32
    return %arg0, %c0_i32 : i32, i32
  }
}

</mosaic_0001>

<llo_original>
// kernel: neural_network_forward.1
$region0: #{neural_network_forward.1}
  #allocation0 [shape = 'u32[]', space=smem, size = 0x4, offset = 0x4, fixed_abs, tag = 'smem constant byte address 0x4 - core index']
  #allocation1 [shape = 'u32[72,128]{1,0:T(1,128)}', space=vmem, size = 0x9000, scoped, tag = 'internal scratch']
  %s0 = inlined_call_operand.vmem [shape: bf16[16,128], index: 0, kind: input, shape index: {}]
  %s1 = inlined_call_operand.hbm [shape: bf16[128,128], index: 1, kind: input, shape index: {}]
  %s2 = inlined_call_operand.vmem [shape: f32[1,128], index: 2, kind: input, shape index: {}]
  %s3 = inlined_call_operand.hbm [shape: bf16[128,128], index: 3, kind: input, shape index: {}]
  %s4 = inlined_call_operand.vmem [shape: f32[1,128], index: 4, kind: input, shape index: {}]
  %s5 = inlined_call_operand.hbm [shape: bf16[128,128], index: 5, kind: input, shape index: {}]
  %s6 = inlined_call_operand.vmem [shape: f32[1,128], index: 6, kind: input, shape index: {}]
  %s7 = inlined_call_operand.vmem [shape: f32[16,128], index: 7, kind: output, shape index: {}]
  %s8 = sld [smem:[#allocation0]]
  $region50: #{neural_network_forward.1} parent=0
    _
  %s10 = ssub.s32 1, %s8
  %s11 = scalar_select 0, %s10, %s8
  $region1: #{neural_network_forward.1} parent=0
    #allocation2 [shape = 'u8[32768]{0}', space=vmem, size = 0x8000, scoped, tag = 'input window, operand 1, single buffered']
    #allocation3 [shape = 's32[1]{0}', space=sflag, size = 0x4, scoped, tag = 'scoped memory for neural_network_forward.1']
    #allocation4 [shape = 'u8[32768]{0}', space=vmem, size = 0x8000, scoped, tag = 'input window, operand 3, single buffered']
    #allocation5 [shape = 's32[1]{0}', space=sflag, size = 0x4, scoped, tag = 'scoped memory for neural_network_forward.1']
    #allocation6 [shape = 'u8[32768]{0}', space=vmem, size = 0x8000, scoped, tag = 'input window, operand 5, single buffered']
    %12 = vsyncpa [#allocation3], 0
    %13 = vsyncpa [#allocation5], 0
    // Predicated region
    $region2: #{neural_network_forward.1} parent=1 // pred_check
      _
    $region3: #{neural_network_forward.1} parent=1 // pred_check_branch
      %15 = sbr.rel (0) target = $region5
    $region4: #{neural_network_forward.1} parent=1 // pred_region
      _
    $region5: #{neural_network_forward.1} parent=1 // pred_fallthru
      _
    // Predicated region
    $region6: #{neural_network_forward.1} parent=1 // pred_check
      _
    $region7: #{neural_network_forward.1} parent=1 // pred_check_branch
      %17 = sbr.rel (0) target = $region9
    $region8: #{neural_network_forward.1} parent=1 // pred_region
      %19 = vsyncadd [#allocation3], 0
      %s20 = sshll.u32 %s1, 4
      %s21 = int_to_ptr.hbm [resolvable:$true] %s20
      %s22 = sshll.u32 [#allocation2], 4
      %s23 = int_to_ptr.vmem [resolvable:$true] %s22
      %28 = dma.hbm_to_vmem [thread:$0]  %s21, 1024, %s23, [#allocation3], 64, 64, 4
    $region9: #{neural_network_forward.1} parent=1 // pred_fallthru
      _
    // Predicated region
    $region10: #{neural_network_forward.1} parent=1 // pred_check
      _
    $region11: #{neural_network_forward.1} parent=1 // pred_check_branch
      %30 = sbr.rel (0) target = $region13
    $region12: #{neural_network_forward.1} parent=1 // pred_region
      _
    $region13: #{neural_network_forward.1} parent=1 // pred_fallthru
      _
    // Predicated region
    $region14: #{neural_network_forward.1} parent=1 // pred_check
      _
    $region15: #{neural_network_forward.1} parent=1 // pred_check_branch
      %32 = sbr.rel (0) target = $region17
    $region16: #{neural_network_forward.1} parent=1 // pred_region
      %34 = vsyncadd [#allocation5], 0
      %s35 = sshll.u32 %s3, 4
      %s36 = int_to_ptr.hbm [resolvable:$true] %s35
      %s37 = sshll.u32 [#allocation4], 4
      %s38 = int_to_ptr.vmem [resolvable:$true] %s37
      %43 = dma.hbm_to_vmem [thread:$0]  %s36, 1024, %s38, [#allocation5], 64, 64, 4
    $region17: #{neural_network_forward.1} parent=1 // pred_fallthru
      _
    // Predicated region
    $region18: #{neural_network_forward.1} parent=1 // pred_check
      _
    $region19: #{neural_network_forward.1} parent=1 // pred_check_branch
      %45 = sbr.rel (0) target = $region21
    $region20: #{neural_network_forward.1} parent=1 // pred_region
      _
    $region21: #{neural_network_forward.1} parent=1 // pred_fallthru
      _
    // Predicated region
    $region22: #{neural_network_forward.1} parent=1 // pred_check
      _
    $region23: #{neural_network_forward.1} parent=1 // pred_check_branch
      %47 = sbr.rel (0) target = $region25
    $region24: #{neural_network_forward.1} parent=1 // pred_region
      %49 = vsyncadd [#allocation5], 0
      %s50 = sshll.u32 %s5, 4
      %s51 = int_to_ptr.hbm [resolvable:$true] %s50
      %s52 = sshll.u32 [#allocation6], 4
      %s53 = int_to_ptr.vmem [resolvable:$true] %s52
      %58 = dma.hbm_to_vmem [thread:$0]  %s51, 1024, %s53, [#allocation5], 64, 64, 4
    $region25: #{neural_network_forward.1} parent=1 // pred_fallthru
      _
    // Predicated region
    $region26: #{neural_network_forward.1} parent=1 // pred_check
      _
    $region27: #{neural_network_forward.1} parent=1 // pred_check_branch
      %60 = sbr.rel (0) target = $region29
    $region28: #{neural_network_forward.1} parent=1 // pred_region
      _
    $region29: #{neural_network_forward.1} parent=1 // pred_fallthru
      _
    // Predicated region
    $region30: #{neural_network_forward.1} parent=1 // pred_check
      _
    $region31: #{neural_network_forward.1} parent=1 // pred_check_branch
      %62 = sbr.rel (0) target = $region33
    $region32: #{neural_network_forward.1} parent=1 // pred_region
      %64 = dma.done [#allocation3], 1024
    $region33: #{neural_network_forward.1} parent=1 // pred_fallthru
      _
    // Predicated region
    $region34: #{neural_network_forward.1} parent=1 // pred_check
      _
    $region35: #{neural_network_forward.1} parent=1 // pred_check_branch
      %66 = sbr.rel (0) target = $region37
    $region36: #{neural_network_forward.1} parent=1 // pred_region
      %68 = dma.done [#allocation5], 1024
    $region37: #{neural_network_forward.1} parent=1 // pred_fallthru
      _
    // Predicated region
    $region38: #{neural_network_forward.1} parent=1 // pred_check
      _
    $region39: #{neural_network_forward.1} parent=1 // pred_check_branch
      %70 = sbr.rel (0) target = $region41
    $region40: #{neural_network_forward.1} parent=1 // pred_region
      %72 = dma.done [#allocation5], 1024
    $region41: #{neural_network_forward.1} parent=1 // pred_fallthru
      _
    %v73 = vld [vmem:[%s0] sm:$0xf]
    %v74 = vld [vmem:[%s0 + $0x4] sm:$0xf]
    %v75 = vld [vmem:[#allocation2] sm:$0xf]
    %v76 = vld [vmem:[#allocation2 + $0x4] sm:$0xf]
    %v77 = vld [vmem:[#allocation2 + $0x8] sm:$0xf]
    %v78 = vld [vmem:[#allocation2 + $0xc] sm:$0xf]
    %v79 = vld [vmem:[#allocation2 + $0x10] sm:$0xf]
    %v80 = vld [vmem:[#allocation2 + $0x14] sm:$0xf]
    %v81 = vld [vmem:[#allocation2 + $0x18] sm:$0xf]
    %v82 = vld [vmem:[#allocation2 + $0x1c] sm:$0xf]
    %v83 = vld [vmem:[#allocation2 + $0x20] sm:$0xf]
    %v84 = vld [vmem:[#allocation2 + $0x24] sm:$0xf]
    %v85 = vld [vmem:[#allocation2 + $0x28] sm:$0xf]
    %v86 = vld [vmem:[#allocation2 + $0x2c] sm:$0xf]
    %v87 = vld [vmem:[#allocation2 + $0x30] sm:$0xf]
    %v88 = vld [vmem:[#allocation2 + $0x34] sm:$0xf]
    %v89 = vld [vmem:[#allocation2 + $0x38] sm:$0xf]
    %v90 = vld [vmem:[#allocation2 + $0x3c] sm:$0xf]
    %v91 = vld [vmem:[%s2] sm:$0x1]
    %v93 = vperm.slane %v91, 0
    %v97 = vunpack.c.l.b16 %v73
    %v98 = vunpack.c.l.b16 %v74
    %v99 = vpack.c.b16 %v98, %v97
    %v117 = vunpack.c.l.b16 %v75
    %v118 = vunpack.c.l.b16 %v76
    %v119 = vunpack.c.l.b16 %v77
    %v120 = vunpack.c.l.b16 %v78
    %v121 = vunpack.c.l.b16 %v79
    %v122 = vunpack.c.l.b16 %v80
    %v123 = vunpack.c.l.b16 %v81
    %v124 = vunpack.c.l.b16 %v82
    %v125 = vunpack.c.l.b16 %v83
    %v126 = vunpack.c.l.b16 %v84
    %v127 = vunpack.c.l.b16 %v85
    %v128 = vunpack.c.l.b16 %v86
    %v129 = vunpack.c.l.b16 %v87
    %v130 = vunpack.c.l.b16 %v88
    %v131 = vunpack.c.l.b16 %v89
    %v132 = vunpack.c.l.b16 %v90
    %v133 = vpack.c.b16 %v118, %v117
    %v134 = vpack.c.b16 %v120, %v119
    %v135 = vpack.c.b16 %v122, %v121
    %v136 = vpack.c.b16 %v124, %v123
    %v137 = vpack.c.b16 %v126, %v125
    %v138 = vpack.c.b16 %v128, %v127
    %v139 = vpack.c.b16 %v130, %v129
    %v140 = vpack.c.b16 %v132, %v131
    %149 = vmatpush.bf16.msra.mxu0 %v140
    %150 = vmatpush.bf16.msra.mxu0 %v139
    %151 = vmatpush.bf16.msra.mxu0 %v138
    %152 = vmatpush.bf16.msra.mxu0 %v137
    %153 = vmatpush.bf16.msra.mxu0 %v136
    %154 = vmatpush.bf16.msra.mxu0 %v135
    %155 = vmatpush.bf16.msra.mxu0 %v134
    %156 = vmatpush.bf16.msra.mxu0 %v133
    %157 = vmatmul.bf16.gmra.mxu0 %v99
    %v158 = vpop.f32.mrf.mxu0
    %v159 = vadd.f32 %v93, %v158
    %v160 = vpop.f32.mrf.mxu0
    %v161 = vadd.f32 %v93, %v160
    %162 = vdwg.mxu0
    %v163 = vmax.f32 %v159, 0.0
    %v164 = vmax.f32 %v161, 0.0
    %v165 = vpack.c.bf16 %v164, %v163
    %v166 = vld [vmem:[#allocation4] sm:$0xf]
    %v167 = vld [vmem:[#allocation4 + $0x4] sm:$0xf]
    %v168 = vld [vmem:[#allocation4 + $0x8] sm:$0xf]
    %v169 = vld [vmem:[#allocation4 + $0xc] sm:$0xf]
    %v170 = vld [vmem:[#allocation4 + $0x10] sm:$0xf]
    %v171 = vld [vmem:[#allocation4 + $0x14] sm:$0xf]
    %v172 = vld [vmem:[#allocation4 + $0x18] sm:$0xf]
    %v173 = vld [vmem:[#allocation4 + $0x1c] sm:$0xf]
    %v174 = vld [vmem:[#allocation4 + $0x20] sm:$0xf]
    %v175 = vld [vmem:[#allocation4 + $0x24] sm:$0xf]
    %v176 = vld [vmem:[#allocation4 + $0x28] sm:$0xf]
    %v177 = vld [vmem:[#allocation4 + $0x2c] sm:$0xf]
    %v178 = vld [vmem:[#allocation4 + $0x30] sm:$0xf]
    %v179 = vld [vmem:[#allocation4 + $0x34] sm:$0xf]
    %v180 = vld [vmem:[#allocation4 + $0x38] sm:$0xf]
    %v181 = vld [vmem:[#allocation4 + $0x3c] sm:$0xf]
    %v182 = vld [vmem:[%s4] sm:$0x1]
    %v184 = vperm.slane %v182, 0
    %v202 = vunpack.c.l.b16 %v166
    %v203 = vunpack.c.l.b16 %v167
    %v204 = vunpack.c.l.b16 %v168
    %v205 = vunpack.c.l.b16 %v169
    %v206 = vunpack.c.l.b16 %v170
    %v207 = vunpack.c.l.b16 %v171
    %v208 = vunpack.c.l.b16 %v172
    %v209 = vunpack.c.l.b16 %v173
    %v210 = vunpack.c.l.b16 %v174
    %v211 = vunpack.c.l.b16 %v175
    %v212 = vunpack.c.l.b16 %v176
    %v213 = vunpack.c.l.b16 %v177
    %v214 = vunpack.c.l.b16 %v178
    %v215 = vunpack.c.l.b16 %v179
    %v216 = vunpack.c.l.b16 %v180
    %v217 = vunpack.c.l.b16 %v181
    %v218 = vpack.c.b16 %v203, %v202
    %v219 = vpack.c.b16 %v205, %v204
    %v220 = vpack.c.b16 %v207, %v206
    %v221 = vpack.c.b16 %v209, %v208
    %v222 = vpack.c.b16 %v211, %v210
    %v223 = vpack.c.b16 %v213, %v212
    %v224 = vpack.c.b16 %v215, %v214
    %v225 = vpack.c.b16 %v217, %v216
    %234 = vmatpush.bf16.msra.mxu0 %v225
    %235 = vmatpush.bf16.msra.mxu0 %v224
    %236 = vmatpush.bf16.msra.mxu0 %v223
    %237 = vmatpush.bf16.msra.mxu0 %v222
    %238 = vmatpush.bf16.msra.mxu0 %v221
    %239 = vmatpush.bf16.msra.mxu0 %v220
    %240 = vmatpush.bf16.msra.mxu0 %v219
    %241 = vmatpush.bf16.msra.mxu0 %v218
    %242 = vmatmul.bf16.gmra.mxu0 %v165
    %v243 = vpop.f32.mrf.mxu0
    %v244 = vadd.f32 %v184, %v243
    %v245 = vpop.f32.mrf.mxu0
    %v246 = vadd.f32 %v184, %v245
    %247 = vdwg.mxu0
    %v248 = vmax.f32 %v244, 0.0
    %v249 = vmax.f32 %v246, 0.0
    %v250 = vpack.c.bf16 %v249, %v248
    %v251 = vld [vmem:[#allocation6] sm:$0xf]
    %v252 = vld [vmem:[#allocation6 + $0x4] sm:$0xf]
    %v253 = vld [vmem:[#allocation6 + $0x8] sm:$0xf]
    %v254 = vld [vmem:[#allocation6 + $0xc] sm:$0xf]
    %v255 = vld [vmem:[#allocation6 + $0x10] sm:$0xf]
    %v256 = vld [vmem:[#allocation6 + $0x14] sm:$0xf]
    %v257 = vld [vmem:[#allocation6 + $0x18] sm:$0xf]
    %v258 = vld [vmem:[#allocation6 + $0x1c] sm:$0xf]
    %v259 = vld [vmem:[#allocation6 + $0x20] sm:$0xf]
    %v260 = vld [vmem:[#allocation6 + $0x24] sm:$0xf]
    %v261 = vld [vmem:[#allocation6 + $0x28] sm:$0xf]
    %v262 = vld [vmem:[#allocation6 + $0x2c] sm:$0xf]
    %v263 = vld [vmem:[#allocation6 + $0x30] sm:$0xf]
    %v264 = vld [vmem:[#allocation6 + $0x34] sm:$0xf]
    %v265 = vld [vmem:[#allocation6 + $0x38] sm:$0xf]
    %v266 = vld [vmem:[#allocation6 + $0x3c] sm:$0xf]
    %v267 = vld [vmem:[%s6] sm:$0x1]
    %v269 = vperm.slane %v267, 0
    %v287 = vunpack.c.l.b16 %v251
    %v288 = vunpack.c.l.b16 %v252
    %v289 = vunpack.c.l.b16 %v253
    %v290 = vunpack.c.l.b16 %v254
    %v291 = vunpack.c.l.b16 %v255
    %v292 = vunpack.c.l.b16 %v256
    %v293 = vunpack.c.l.b16 %v257
    %v294 = vunpack.c.l.b16 %v258
    %v295 = vunpack.c.l.b16 %v259
    %v296 = vunpack.c.l.b16 %v260
    %v297 = vunpack.c.l.b16 %v261
    %v298 = vunpack.c.l.b16 %v262
    %v299 = vunpack.c.l.b16 %v263
    %v300 = vunpack.c.l.b16 %v264
    %v301 = vunpack.c.l.b16 %v265
    %v302 = vunpack.c.l.b16 %v266
    %v303 = vpack.c.b16 %v288, %v287
    %v304 = vpack.c.b16 %v290, %v289
    %v305 = vpack.c.b16 %v292, %v291
    %v306 = vpack.c.b16 %v294, %v293
    %v307 = vpack.c.b16 %v296, %v295
    %v308 = vpack.c.b16 %v298, %v297
    %v309 = vpack.c.b16 %v300, %v299
    %v310 = vpack.c.b16 %v302, %v301
    %319 = vmatpush.bf16.msra.mxu0 %v310
    %320 = vmatpush.bf16.msra.mxu0 %v309
    %321 = vmatpush.bf16.msra.mxu0 %v308
    %322 = vmatpush.bf16.msra.mxu0 %v307
    %323 = vmatpush.bf16.msra.mxu0 %v306
    %324 = vmatpush.bf16.msra.mxu0 %v305
    %325 = vmatpush.bf16.msra.mxu0 %v304
    %326 = vmatpush.bf16.msra.mxu0 %v303
    %327 = vmatmul.bf16.gmra.mxu0 %v250
    %v328 = vpop.f32.mrf.mxu0
    %v329 = vadd.f32 %v269, %v328
    %v330 = vpop.f32.mrf.mxu0
    %v331 = vadd.f32 %v269, %v330
    %332 = vdwg.mxu0
    %333 = vst [vmem:[%s7] sm:$0xff] %v329
    %334 = vst [vmem:[%s7 + $0x8] sm:$0xff] %v331
    // Predicated region
    $region42: #{neural_network_forward.1} parent=1 // pred_check
      _
    $region43: #{neural_network_forward.1} parent=1 // pred_check_branch
      %336 = sbr.rel (0) target = $region45
    $region44: #{neural_network_forward.1} parent=1 // pred_region
      _
    $region45: #{neural_network_forward.1} parent=1 // pred_fallthru
      _
    // Predicated region
    $region46: #{neural_network_forward.1} parent=1 // pred_check
      _
    $region47: #{neural_network_forward.1} parent=1 // pred_check_branch
      %338 = sbr.rel (0) target = $region49
    $region48: #{neural_network_forward.1} parent=1 // pred_region
      _
    $region49: #{neural_network_forward.1} parent=1 // pred_fallthru
      _
    %339 = vsyncpa [#allocation3], 1
    %340 = vsyncpa [#allocation5], 1

</llo_original>
